<compile_context>
chip_gen: v5e
topology: v5e:2x2
jax: 0.10.0
libtpu: 0.0.40
codegen_flags: <defaults>
</compile_context>

<pallas_src>
import jax
import jax.numpy as jnp
from jax.experimental import pallas as pl
from jax.experimental.pallas import tpu as pltpu


def _distmult_kernel(e1_ref, r_ref, e2_ref, o_ref):
    e1 = e1_ref[...].astype(jnp.float32)      # (TB, D)
    r = r_ref[...].astype(jnp.float32)        # (TB, D)
    e2 = e2_ref[...].astype(jnp.float32)      # (TB, D)
    # VPU elementwise product + XLU lane reduction; one scalar per row.
    o_ref[...] = jnp.sum(e1 * r * e2, axis=1, keepdims=True)   # (TB, 1)


def _pick_block_b(B, D):
    """Largest power-of-two row tile that divides B, fits a conservative
    double-buffered VMEM budget, and keeps the grid >= 2 steps if possible."""
    d_pad = ((D + 127) // 128) * 128           # lane padding for D < 128
    budget = 12 * 1024 * 1024                  # under v5e's 16 MiB scoped default
    per_row = 2 * 3 * d_pad * 4                # 2 buffers x 3 inputs x f32 bytes
    cap = max(1, budget // per_row)
    cap = min(cap, 1024)
    if B >= 16:
        cap = min(cap, B // 2)                 # keep >= 2 grid steps (v7x megacore)
    block_b = 1
    while block_b * 2 <= cap and B % (block_b * 2) == 0:
        block_b *= 2
    # Sublane alignment: block rows must be a multiple of 8 or the full batch.
    if block_b % 8 != 0 and block_b != B:
        block_b = B
    return block_b


def distmult_forward(e1, r, e2, *, feat_drop=0.0, block_b=None):
    """Pallas DistMult scoring.  e1, r, e2: (B, D); returns (B,) float32."""
    B, D = e1.shape
    assert r.shape == (B, D) and e2.shape == (B, D)

    # TODO(synk): F.dropout(training=True) is stochastic; eval-mode identity
    # (feat_drop ignored) is used here for deterministic semantics.
    del feat_drop

    if block_b is None:
        block_b = _pick_block_b(B, D)
    assert B % block_b == 0

    out = pl.pallas_call(
        _distmult_kernel,
        out_shape=jax.ShapeDtypeStruct((B, 1), jnp.float32),
        grid_spec=pltpu.PrefetchScalarGridSpec(
            num_scalar_prefetch=0,
            grid=(B // block_b,),
            in_specs=[
                pl.BlockSpec((block_b, D), lambda i: (i, 0)),   # e1 tile
                pl.BlockSpec((block_b, D), lambda i: (i, 0)),   # r  tile
                pl.BlockSpec((block_b, D), lambda i: (i, 0)),   # e2 tile
            ],
            out_specs=pl.BlockSpec((block_b, 1), lambda i: (i, 0)),
        ),
        compiler_params=pltpu.CompilerParams(
            dimension_semantics=("parallel",)),
    )(e1, r, e2)
    return out[:, 0]


def _reference(e1, r, e2):
    return jnp.sum(e1.astype(jnp.float32) * r.astype(jnp.float32)
                   * e2.astype(jnp.float32), axis=1)


if __name__ == "__main__":
    B, D = 64, 32          # batch of triples, embedding dim

    key = jax.random.PRNGKey(0)
    k1, k2, k3 = jax.random.split(key, 3)
    e1 = jax.random.normal(k1, (B, D), dtype=jnp.float32)
    r = jax.random.normal(k2, (B, D), dtype=jnp.float32)
    e2 = jax.random.normal(k3, (B, D), dtype=jnp.float32)

    pred = distmult_forward(e1, r, e2, feat_drop=0.0)
    pred = jax.block_until_ready(pred)

    ref = _reference(e1, r, e2)
    assert pred.shape == (B,)
    assert jnp.allclose(pred, ref, atol=1e-5, rtol=1e-5), (pred, ref)

    # bf16 storage path (perf feedback): halve HBM bytes, accumulate in f32.
    pred_bf16 = distmult_forward(e1.astype(jnp.bfloat16),
                                 r.astype(jnp.bfloat16),
                                 e2.astype(jnp.bfloat16))
    pred_bf16 = jax.block_until_ready(pred_bf16)
    ref_bf16 = _reference(e1.astype(jnp.bfloat16), r.astype(jnp.bfloat16),
                          e2.astype(jnp.bfloat16))
    assert jnp.allclose(pred_bf16, ref_bf16, atol=1e-2, rtol=1e-2)

    print("KERNEL_OK")
</pallas_src>

<mosaic_0001>
module attributes {stable_mosaic.version = 11 : i64} {
  func.func @_distmult_kernel(%arg0: i32, %arg1: memref<32x32xf32, #tpu.memory_space<vmem>>, %arg2: memref<32x32xf32, #tpu.memory_space<vmem>>, %arg3: memref<32x32xf32, #tpu.memory_space<vmem>>, %arg4: memref<32x1xf32, #tpu.memory_space<vmem>>) attributes {dimension_semantics = [#tpu.dimension_semantics<parallel>], iteration_bounds = array<i64: 2>, scalar_prefetch = 0 : i64, scratch_operands = 0 : i64, tpu.core_type = #tpu.core_type<tc>, window_params = [{transform_indices = @transform_0, window_bounds = array<i64: 32, 32>}, {transform_indices = @transform_1, window_bounds = array<i64: 32, 32>}, {transform_indices = @transform_2, window_bounds = array<i64: 32, 32>}, {transform_indices = @transform_3, window_bounds = array<i64: 32, 1>}]} {
    %c0 = arith.constant 0 : index
    %c0_0 = arith.constant 0 : index
    %0 = vector.load %arg1[%c0, %c0_0] : memref<32x32xf32, #tpu.memory_space<vmem>>, vector<32x32xf32>
    %c0_1 = arith.constant 0 : index
    %c0_2 = arith.constant 0 : index
    %1 = vector.load %arg2[%c0_1, %c0_2] : memref<32x32xf32, #tpu.memory_space<vmem>>, vector<32x32xf32>
    %c0_3 = arith.constant 0 : index
    %c0_4 = arith.constant 0 : index
    %2 = vector.load %arg3[%c0_3, %c0_4] : memref<32x32xf32, #tpu.memory_space<vmem>>, vector<32x32xf32>
    %3 = arith.mulf %0, %1 : vector<32x32xf32>
    %4 = arith.mulf %3, %2 : vector<32x32xf32>
    %cst = arith.constant dense<0.000000e+00> : vector<32xf32>
    %5 = vector.multi_reduction <add>, %4, %cst [1] : vector<32x32xf32> to vector<32xf32>
    %6 = vector.shape_cast %5 : vector<32xf32> to vector<32x1xf32>
    %c0_5 = arith.constant 0 : index
    %c0_6 = arith.constant 0 : index
    %7 = vector.load %arg4[%c0_5, %c0_6] : memref<32x1xf32, #tpu.memory_space<vmem>>, vector<32x1xf32>
    tpu.vector_store %arg4[%c0_5, %c0_6], %6 {strides = array<i32>} : memref<32x1xf32, #tpu.memory_space<vmem>>, vector<32x1xf32>,
    return
  }
  func.func @transform_0(%arg0: i32) -> (i32, i32) {
    %c0_i32 = arith.constant 0 : i32
    %c0_i32_0 = arith.constant 0 : i32
    return %arg0, %c0_i32 : i32, i32
  }
  func.func @transform_1(%arg0: i32) -> (i32, i32) {
    %c0_i32 = arith.constant 0 : i32
    %c0_i32_0 = arith.constant 0 : i32
    return %arg0, %c0_i32 : i32, i32
  }
  func.func @transform_2(%arg0: i32) -> (i32, i32) {
    %c0_i32 = arith.constant 0 : i32
    %c0_i32_0 = arith.constant 0 : i32
    return %arg0, %c0_i32 : i32, i32
  }
  func.func @transform_3(%arg0: i32) -> (i32, i32) {
    %c0_i32 = arith.constant 0 : i32
    %c0_i32_0 = arith.constant 0 : i32
    return %arg0, %c0_i32 : i32, i32
  }
}

</mosaic_0001>

<llo_original>
// kernel: tpu_custom_call.1
$region0: #{tpu_custom_call.1}
  #allocation0 [shape = 'u32[]', space=smem, size = 0x4, offset = 0x4, fixed_abs, tag = 'smem constant byte address 0x4 - core index']
  #allocation1 [shape = 'u32[72,128]{1,0:T(1,128)}', space=vmem, size = 0x9000, scoped, tag = 'internal scratch']
  %s0 = inlined_call_operand.vmem [shape: f32[64,32], index: 0, kind: input, shape index: {}]
  %s1 = inlined_call_operand.vmem [shape: f32[64,32], index: 1, kind: input, shape index: {}]
  %s2 = inlined_call_operand.vmem [shape: f32[64,32], index: 2, kind: input, shape index: {}]
  %s3 = inlined_call_operand.vmem [shape: f32[64,1], index: 3, kind: output, shape index: {}]
  %s4 = sld [smem:[#allocation0]]
  $region45: #{tpu_custom_call.1} parent=0
    _
  %s6 = ssub.s32 1, %s4
  %s7 = scalar_select 0, %s6, %s4
  loop: start=0, step=1, limit=4
  $region2: #{tpu_custom_call.1} parent=0 // loop_pre_header
    _
  $region3: #{tpu_custom_call.1} parent=0 // loop_header
    %s9 = sphi 0, %s13
    %p10 = scmp.ge.s32.totalorder %s9, 4
    %s19 = sphi 0, %s21
    %s22 = sphi 0, %s19
    %s23 = sphi 0, %s22
    %s39 = sphi 0, %s23
    %s45 = sphi 0, %s47
    %s48 = sphi 0, %s45
    %s49 = sphi 0, %s48
    %s65 = sphi 0, %s49
    %s71 = sphi 0, %s73
    %s74 = sphi 0, %s71
    %s75 = sphi 0, %s74
    %s91 = sphi 0, %s75
    %s97 = sphi 0, %s99
    %s100 = sphi 0, %s97
    %s101 = sphi 0, %s100
    %s117 = sphi 0, %s101
  $region4: #{tpu_custom_call.1} parent=0 // loop_header_branch
    %12 = sbr.rel (%p10) target = $region8
  $region5: #{tpu_custom_call.1} parent=0 // loop_body
    %s14 = ssub.s32 %s9, 1
    %s15 = ssub.s32 %s9, 2
    %s16 = sadd.s32 %s9, 1
    %s17 = ssub.s32 %s9, %s16
    %p18 = scmp.eq.s32.totalorder %s17, 0
    %s20 = sadd.s32 %s19, 1
    %s21 = scalar_select %p18, %s19, %s20
    %p24 = pneg %p18
    %p25 = scmp.eq.s32.totalorder %s9, 1
    %p26 = por %p24, %p25
    %p27 = scmp.ne.s32.totalorder %s19, %s22
    %p28 = scmp.eq.s32.totalorder %s9, 0
    %p29 = por %p27, %p28
    %p30 = scmp.ne.s32.totalorder %s19, %s22
    %p31 = scmp.eq.s32.totalorder %s14, 1
    %p32 = por %p30, %p31
    %p33 = scmp.ne.s32.totalorder %s22, %s23
    %p34 = scmp.eq.s32.totalorder %s14, 0
    %p35 = por %p33, %p34
    %p36 = scmp.ne.s32.totalorder %s22, %s23
    %p37 = scmp.eq.s32.totalorder %s15, 1
    %p38 = por %p36, %p37
    %p40 = scmp.ne.s32.totalorder %s23, %s39
    %p41 = scmp.eq.s32.totalorder %s15, 0
    %p42 = por %p40, %p41
    %s43 = ssub.s32 %s9, %s16
    %p44 = scmp.eq.s32.totalorder %s43, 0
    %s46 = sadd.s32 %s45, 1
    %s47 = scalar_select %p44, %s45, %s46
    %p50 = pneg %p44
    %p51 = scmp.eq.s32.totalorder %s9, 1
    %p52 = por %p50, %p51
    %p53 = scmp.ne.s32.totalorder %s45, %s48
    %p54 = scmp.eq.s32.totalorder %s9, 0
    %p55 = por %p53, %p54
    %p56 = scmp.ne.s32.totalorder %s45, %s48
    %p57 = scmp.eq.s32.totalorder %s14, 1
    %p58 = por %p56, %p57
    %p59 = scmp.ne.s32.totalorder %s48, %s49
    %p60 = scmp.eq.s32.totalorder %s14, 0
    %p61 = por %p59, %p60
    %p62 = scmp.ne.s32.totalorder %s48, %s49
    %p63 = scmp.eq.s32.totalorder %s15, 1
    %p64 = por %p62, %p63
    %p66 = scmp.ne.s32.totalorder %s49, %s65
    %p67 = scmp.eq.s32.totalorder %s15, 0
    %p68 = por %p66, %p67
    %s69 = ssub.s32 %s9, %s16
    %p70 = scmp.eq.s32.totalorder %s69, 0
    %s72 = sadd.s32 %s71, 1
    %s73 = scalar_select %p70, %s71, %s72
    %p76 = pneg %p70
    %p77 = scmp.eq.s32.totalorder %s9, 1
    %p78 = por %p76, %p77
    %p79 = scmp.ne.s32.totalorder %s71, %s74
    %p80 = scmp.eq.s32.totalorder %s9, 0
    %p81 = por %p79, %p80
    %p82 = scmp.ne.s32.totalorder %s71, %s74
    %p83 = scmp.eq.s32.totalorder %s14, 1
    %p84 = por %p82, %p83
    %p85 = scmp.ne.s32.totalorder %s74, %s75
    %p86 = scmp.eq.s32.totalorder %s14, 0
    %p87 = por %p85, %p86
    %p88 = scmp.ne.s32.totalorder %s74, %s75
    %p89 = scmp.eq.s32.totalorder %s15, 1
    %p90 = por %p88, %p89
    %p92 = scmp.ne.s32.totalorder %s75, %s91
    %p93 = scmp.eq.s32.totalorder %s15, 0
    %p94 = por %p92, %p93
    %s95 = ssub.s32 %s9, %s16
    %p96 = scmp.eq.s32.totalorder %s95, 0
    %s98 = sadd.s32 %s97, 1
    %s99 = scalar_select %p96, %s97, %s98
    %p102 = pneg %p96
    %p103 = scmp.eq.s32.totalorder %s9, 1
    %p104 = por %p102, %p103
    %p105 = scmp.ne.s32.totalorder %s97, %s100
    %p106 = scmp.eq.s32.totalorder %s9, 0
    %p107 = por %p105, %p106
    %p108 = scmp.ne.s32.totalorder %s97, %s100
    %p109 = scmp.eq.s32.totalorder %s14, 1
    %p110 = por %p108, %p109
    %p111 = scmp.ne.s32.totalorder %s100, %s101
    %p112 = scmp.eq.s32.totalorder %s14, 0
    %p113 = por %p111, %p112
    %p114 = scmp.ne.s32.totalorder %s100, %s101
    %p115 = scmp.eq.s32.totalorder %s15, 1
    %p116 = por %p114, %p115
    %p118 = scmp.ne.s32.totalorder %s101, %s117
    %p119 = scmp.eq.s32.totalorder %s15, 0
    %p120 = por %p118, %p119
    %p121 = scmp.le.s32.totalorder 1, %s9
    %p122 = scmp.lt.s32.totalorder %s9, 3
    %p123 = pnand %p121, %p122
    %p124 = pneg %p123
    // Predicated region
    $region9: #{tpu_custom_call.1} parent=5 // pred_check
      _
    $region10: #{tpu_custom_call.1} parent=5 // pred_check_branch
      %126 = sbr.rel (%p123) target = $region12
    $region11: #{tpu_custom_call.1} parent=5 // pred_region
      %s127 = ssub.s32 %s9, 1
    $region12: #{tpu_custom_call.1} parent=5 // pred_fallthru
      _
    %p128 = scmp.lt.s32.totalorder %s9, 2
    // Predicated region
    $region13: #{tpu_custom_call.1} parent=5 // pred_check
      %p129 = pneg %p128
    $region14: #{tpu_custom_call.1} parent=5 // pred_check_branch
      %131 = sbr.rel (%p129) target = $region16
    $region15: #{tpu_custom_call.1} parent=5 // pred_region
      // Predicated region
      $region17: #{tpu_custom_call.1} parent=15 // pred_check
        %p132 = pneg %p29
      $region18: #{tpu_custom_call.1} parent=15 // pred_check_branch
        %134 = sbr.rel (%p132) target = $region20
      $region19: #{tpu_custom_call.1} parent=15 // pred_region
        %s135 = smul.u32 4, %s9
        %p136 = scmp.lt.s32.totalorder %s135, 7
        %s137 = scalar_select %p136, %s135, 7
        %s138 = smul.addr %s137, 8
        %s139 = scalar_lea.vmem %s0, %s138
        %s140 = smul.u32 4, %s9
      $region20: #{tpu_custom_call.1} parent=15 // pred_fallthru
        _
      // Predicated region
      $region21: #{tpu_custom_call.1} parent=15 // pred_check
        %p141 = pneg %p55
      $region22: #{tpu_custom_call.1} parent=15 // pred_check_branch
        %143 = sbr.rel (%p141) target = $region24
      $region23: #{tpu_custom_call.1} parent=15 // pred_region
        %s144 = smul.u32 4, %s9
        %p145 = scmp.lt.s32.totalorder %s144, 7
        %s146 = scalar_select %p145, %s144, 7
        %s147 = smul.addr %s146, 8
        %s148 = scalar_lea.vmem %s1, %s147
        %s149 = smul.u32 4, %s9
      $region24: #{tpu_custom_call.1} parent=15 // pred_fallthru
        _
      // Predicated region
      $region25: #{tpu_custom_call.1} parent=15 // pred_check
        %p150 = pneg %p81
      $region26: #{tpu_custom_call.1} parent=15 // pred_check_branch
        %152 = sbr.rel (%p150) target = $region28
      $region27: #{tpu_custom_call.1} parent=15 // pred_region
        %s153 = smul.u32 4, %s9
        %p154 = scmp.lt.s32.totalorder %s153, 7
        %s155 = scalar_select %p154, %s153, 7
        %s156 = smul.addr %s155, 8
        %s157 = scalar_lea.vmem %s2, %s156
        %s158 = smul.u32 4, %s9
      $region28: #{tpu_custom_call.1} parent=15 // pred_fallthru
        _
    $region16: #{tpu_custom_call.1} parent=5 // pred_fallthru
      _
    %p159 = scmp.le.s32.totalorder 1, %s9
    %p160 = scmp.lt.s32.totalorder %s9, 3
    %p161 = pnand %p159, %p160
    %p162 = pneg %p161
    // Predicated region
    $region29: #{tpu_custom_call.1} parent=5 // pred_check
      _
    $region30: #{tpu_custom_call.1} parent=5 // pred_check_branch
      %164 = sbr.rel (%p161) target = $region32
    $region31: #{tpu_custom_call.1} parent=5 // pred_region
      %s165 = ssub.s32 %s9, 1
      %s166 = smul.u32 4, %s14
      %p167 = scmp.lt.s32.totalorder %s166, 7
      %s168 = scalar_select %p167, %s166, 7
      %s169 = smul.addr %s168, 8
      %s170 = scalar_lea.vmem %s0, %s169
      %p171 = pneg %p35
      %p172 = pneg %p32
      %s173 = smul.u32 4, %s14
      %p174 = scmp.lt.s32.totalorder %s173, 7
      %s175 = scalar_select %p174, %s173, 7
      %s176 = smul.addr %s175, 8
      %s177 = scalar_lea.vmem %s1, %s176
      %p178 = pneg %p61
      %p179 = pneg %p58
      %s180 = smul.u32 4, %s14
      %p181 = scmp.lt.s32.totalorder %s180, 7
      %s182 = scalar_select %p181, %s180, 7
      %s183 = smul.addr %s182, 8
      %s184 = scalar_lea.vmem %s2, %s183
      %p185 = pneg %p87
      %p186 = pneg %p84
      %p187 = pneg %p113
      %p188 = pneg %p110
      %s189 = smul.u32 4, %s14
      %p190 = scmp.lt.s32.totalorder %s189, 7
      %s191 = scalar_select %p190, %s189, 7
      %s192 = smul.addr %s191, 8
      %s193 = scalar_lea.vmem %s3, %s192
      %s194 = smul.u32 4, %s14
      %p195 = scmp.lt.s32.totalorder %s194, 7
      %s196 = scalar_select %p195, %s194, 7
      %s197 = smul.addr %s196, 8
      %s198 = scalar_lea.vmem %s0, %s197
      %s199 = smul.u32 4, %s14
      %s200 = smul.u32 4, %s14
      %p201 = scmp.lt.s32.totalorder %s200, 7
      %s202 = scalar_select %p201, %s200, 7
      %s203 = smul.addr %s202, 8
      %s204 = scalar_lea.vmem %s1, %s203
      %s205 = smul.u32 4, %s14
      %s206 = smul.u32 4, %s14
      %p207 = scmp.lt.s32.totalorder %s206, 7
      %s208 = scalar_select %p207, %s206, 7
      %s209 = smul.addr %s208, 8
      %s210 = scalar_lea.vmem %s2, %s209
      %s211 = smul.u32 4, %s14
      %s212 = smul.u32 4, %s14
      %p213 = scmp.lt.s32.totalorder %s212, 7
      %s214 = scalar_select %p213, %s212, 7
      %s215 = smul.addr %s214, 8
      %s216 = scalar_lea.vmem %s3, %s215
      %s217 = smul.u32 4, %s14
      %v218 = vld [vmem:[%s198] sm:$0xff]
      %v219 = vld [vmem:[%s198 + $0x8] sm:$0xff]
      %v220 = vld [vmem:[%s198 + $0x10] sm:$0xff]
      %v221 = vld [vmem:[%s198 + $0x18] sm:$0xff]
      %v222 = vld [vmem:[%s204] sm:$0xff]
      %v223 = vld [vmem:[%s204 + $0x8] sm:$0xff]
      %v224 = vld [vmem:[%s204 + $0x10] sm:$0xff]
      %v225 = vld [vmem:[%s204 + $0x18] sm:$0xff]
      %v226 = vld [vmem:[%s210] sm:$0xff]
      %v227 = vld [vmem:[%s210 + $0x8] sm:$0xff]
      %v228 = vld [vmem:[%s210 + $0x10] sm:$0xff]
      %v229 = vld [vmem:[%s210 + $0x18] sm:$0xff]
      %v230 = vmul.f32 %v218, %v222
      %v231 = vmul.f32 %v219, %v223
      %v232 = vmul.f32 %v220, %v224
      %v233 = vmul.f32 %v221, %v225
      %v234 = vmul.f32 %v230, %v226
      %v235 = vmul.f32 %v231, %v227
      %v236 = vmul.f32 %v232, %v228
      %v237 = vmul.f32 %v233, %v229
      %vm238 = vcmask 261120
      %v239 = vsel %vm238, %v234, 0.0
      %240 = vadd.xlane.f32.xlu0 %v239
      %v241 = vpop.xlane.xlu0 %240
      %v242 = vsel %vm238, %v235, 0.0
      %243 = vadd.xlane.f32.xlu0 %v242
      %v244 = vpop.xlane.xlu0 %243
      %v245 = vsel %vm238, %v236, 0.0
      %246 = vadd.xlane.f32.xlu0 %v245
      %v247 = vpop.xlane.xlu0 %246
      %v248 = vsel %vm238, %v237, 0.0
      %249 = vadd.xlane.f32.xlu0 %v248
      %v250 = vpop.xlane.xlu0 %249
      %vm251 = vcmask 7168
      %252 = vst.msk [vmem:[%s216] sm:$0xff] %vm251, %v241
      %253 = vst.msk [vmem:[%s216 + $0x8] sm:$0xff] %vm251, %v244
      %254 = vst.msk [vmem:[%s216 + $0x10] sm:$0xff] %vm251, %v247
      %255 = vst.msk [vmem:[%s216 + $0x18] sm:$0xff] %vm251, %v250
      %s256 = smul.u32 4, %s14
      %p257 = scmp.lt.s32.totalorder %s256, 7
      %s258 = scalar_select %p257, %s256, 7
      %s259 = smul.addr %s258, 8
      %s260 = scalar_lea.vmem %s3, %s259
      // Predicated region
      $region33: #{tpu_custom_call.1} parent=31 // pred_check
        %p261 = pneg %p110
      $region34: #{tpu_custom_call.1} parent=31 // pred_check_branch
        %263 = sbr.rel (%p261) target = $region36
      $region35: #{tpu_custom_call.1} parent=31 // pred_region
        %s264 = smul.u32 4, %s14
      $region36: #{tpu_custom_call.1} parent=31 // pred_fallthru
        _
    $region32: #{tpu_custom_call.1} parent=5 // pred_fallthru
      _
    %p265 = scmp.le.s32.totalorder 2, %s9
    // Predicated region
    $region37: #{tpu_custom_call.1} parent=5 // pred_check
      %p266 = pneg %p265
    $region38: #{tpu_custom_call.1} parent=5 // pred_check_branch
      %268 = sbr.rel (%p266) target = $region40
    $region39: #{tpu_custom_call.1} parent=5 // pred_region
      %s269 = ssub.s32 %s9, 2
      // Predicated region
      $region41: #{tpu_custom_call.1} parent=39 // pred_check
        %p270 = pneg %p116
      $region42: #{tpu_custom_call.1} parent=39 // pred_check_branch
        %272 = sbr.rel (%p270) target = $region44
      $region43: #{tpu_custom_call.1} parent=39 // pred_region
        %s273 = smul.u32 4, %s15
        %p274 = scmp.lt.s32.totalorder %s273, 7
        %s275 = scalar_select %p274, %s273, 7
        %s276 = smul.addr %s275, 8
        %s277 = scalar_lea.vmem %s3, %s276
      $region44: #{tpu_custom_call.1} parent=39 // pred_fallthru
        _
    $region40: #{tpu_custom_call.1} parent=5 // pred_fallthru
      _
  $region6: #{tpu_custom_call.1} parent=0 // loop_footer
    %s13 = sadd.s32 1, %s9
  $region7: #{tpu_custom_call.1} parent=0 // loop_footer_branch
    %8 = sbr.rel target = $region3
  $region8: #{tpu_custom_call.1} parent=0 // loop_exit
    _

</llo_original>
